<compile_context>
chip_gen: v5e
topology: v5e:2x2
jax: 0.10.0
libtpu: 0.0.40
codegen_flags: <defaults>
</compile_context>

<pallas_src>
import functools

import jax
import jax.numpy as jnp
from jax.experimental import pallas as pl
from jax.experimental.pallas import tpu as pltpu


def _round_up(x, m):
    return (x + m - 1) // m * m


def _knn_kernel(x_ref, w_ref, b_ref, tr_ref, out_ref,
                feat_sc, fsq_sc, m1_sc, m2_sc,
                *, n_valid, tile_n, needs_mask):
    # x_ref:   [TB, F]   bf16  flattened test images (B-tile)
    # w_ref:   [F, Dp]   bf16  encoder weight (resident across N-tiles)
    # b_ref:   [1, Dp]   f32   encoder bias
    # tr_ref:  [Dp, TN]  bf16  train features, pre-transposed (lane-dense on N)
    # out_ref: [TB, 1]   f32   sum of two smallest squared-L2 distances
    j = pl.program_id(1)

    # ---- encoder forward + accumulator init (once per B-tile) -----------
    @pl.when(j == 0)
    def _():
        feat = jnp.dot(x_ref[...], w_ref[...],
                       preferred_element_type=jnp.float32) + b_ref[...]
        feat_sc[...] = feat
        fsq_sc[...] = jnp.sum(feat * feat, axis=1, keepdims=True)
        m1_sc[...] = jnp.full_like(m1_sc, jnp.inf)
        m2_sc[...] = jnp.full_like(m2_sc, jnp.inf)

    # ---- streamed distance tile: d' = ||t||^2 - 2 f.t -------------------
    tr = tr_ref[...].astype(jnp.float32)                              # [Dp, TN]
    feat = feat_sc[...]                                               # [TB, Dp]
    cross = jnp.dot(feat, tr, preferred_element_type=jnp.float32)     # [TB, TN]
    t_sq = jnp.sum(tr * tr, axis=0, keepdims=True)                    # [1,  TN]
    dp = t_sq - 2.0 * cross                                           # [TB, TN]

    if needs_mask:  # only generated when N was padded (static)
        col = jax.lax.broadcasted_iota(jnp.int32, dp.shape, 1) + j * tile_n
        dp = jnp.where(col < n_valid, dp, jnp.inf)

    # ---- tile top-2 (duplicate-aware, no per-element iota array) --------
    t1 = jnp.min(dp, axis=1, keepdims=True)
    t2_strict = jnp.min(jnp.where(dp > t1, dp, jnp.inf), axis=1, keepdims=True)
    dup = jnp.sum((dp <= t1).astype(jnp.float32), axis=1, keepdims=True)
    t2 = jnp.where(dup >= 2.0, t1, t2_strict)

    # ---- merge into running top-2 accumulator ----------------------------
    m1_old = m1_sc[...]
    m2_old = m2_sc[...]
    m1_sc[...] = jnp.minimum(m1_old, t1)
    m2_sc[...] = jnp.minimum(jnp.minimum(m2_old, t2),
                             jnp.maximum(m1_old, t1))

    # ---- finalize: re-add ||f||^2, clamp, lane-friendly [TB,1] store -----
    @pl.when(j == pl.num_programs(1) - 1)
    def _():
        fsq = fsq_sc[...]
        d1 = jnp.maximum(m1_sc[...] + fsq, 0.0)
        d2 = jnp.maximum(m2_sc[...] + fsq, 0.0)
        out_ref[...] = d1 + d2


def wrap_model_1_forward(x_nchw, enc_w, enc_b, train_features):
    """x_nchw: [B, C, H, W]; enc_w: [F, D]; enc_b: [D]; train: [N, D]."""
    B, C, H, W = x_nchw.shape
    F = C * H * W
    D = enc_w.shape[1]
    N = train_features.shape[0]

    # ---- MXU / lane-aligned padded shapes & tiles ------------------------
    TB = min(128, _round_up(B, 8))
    B_pad = _round_up(B, TB)
    D_pad = _round_up(D, 128)
    TN = min(512, _round_up(N, 128))
    N_pad = _round_up(N, TN)

    # ---- pad + cast inputs (bf16 for the two large operands) -------------
    x_flat = x_nchw.reshape(B, F)
    x_p = jnp.zeros((B_pad, F), jnp.bfloat16).at[:B].set(
        x_flat.astype(jnp.bfloat16))
    w_p = jnp.zeros((F, D_pad), jnp.bfloat16).at[:, :D].set(
        enc_w.astype(jnp.bfloat16))
    b_p = jnp.zeros((1, D_pad), jnp.float32).at[:, :D].set(
        enc_b.astype(jnp.float32)[None, :])
    # pre-transpose train -> [D_pad, N_pad]: lane-dense along N, no in-kernel T
    tr_t = jnp.zeros((D_pad, N_pad), jnp.bfloat16).at[:D, :N].set(
        train_features.astype(jnp.bfloat16).T)

    grid = (B_pad // TB, N_pad // TN)

    kernel = functools.partial(
        _knn_kernel, n_valid=N, tile_n=TN, needs_mask=(N_pad != N))

    # explicit scoped-VMEM budget from the chosen tiles (+headroom)
    est = (2 * TB * F * 2            # x block, double-buffered, bf16
           + 2 * F * D_pad * 2       # W block
           + 2 * 1 * D_pad * 4       # bias
           + 2 * D_pad * TN * 2      # train tile
           + 2 * TB * 128 * 4        # output block (lane-padded)
           + TB * D_pad * 4          # feat scratch
           + 3 * TB * 128 * 4)       # fsq/m1/m2 scratch (lane-padded)
    vmem_limit = min(max(2 * est, 16 << 20), 64 << 20)

    out = pl.pallas_call(
        kernel,
        out_shape=jax.ShapeDtypeStruct((B_pad, 1), jnp.float32),
        grid_spec=pltpu.PrefetchScalarGridSpec(
            num_scalar_prefetch=0,
            grid=grid,
            in_specs=[
                pl.BlockSpec((TB, F), lambda i, j: (i, 0)),
                pl.BlockSpec((F, D_pad), lambda i, j: (0, 0)),
                pl.BlockSpec((1, D_pad), lambda i, j: (0, 0)),
                pl.BlockSpec((D_pad, TN), lambda i, j: (0, j)),
            ],
            out_specs=pl.BlockSpec((TB, 1), lambda i, j: (i, 0)),
            scratch_shapes=[
                pltpu.VMEM((TB, D_pad), jnp.float32),   # feat
                pltpu.VMEM((TB, 1), jnp.float32),       # ||feat||^2
                pltpu.VMEM((TB, 1), jnp.float32),       # running min1
                pltpu.VMEM((TB, 1), jnp.float32),       # running min2
            ]),
        compiler_params=pltpu.CompilerParams(
            dimension_semantics=("parallel", "arbitrary"),
            vmem_limit_bytes=vmem_limit),
    )(x_p, w_p, b_p, tr_t)

    return out[:B, 0]


def _reference(x_nchw, enc_w, enc_b, train_features):
    # Mirrors the kernel's bf16 storage of x/W/train with f32 accumulation.
    B = x_nchw.shape[0]
    xb = x_nchw.reshape(B, -1).astype(jnp.bfloat16).astype(jnp.float32)
    wb = enc_w.astype(jnp.bfloat16).astype(jnp.float32)
    tb = train_features.astype(jnp.bfloat16).astype(jnp.float32)
    feat = xb @ wb + enc_b.astype(jnp.float32)
    d = (jnp.sum(feat ** 2, axis=1, keepdims=True)
         + jnp.sum(tb ** 2, axis=1)[None, :]
         - 2.0 * feat @ tb.T)
    d = jnp.maximum(d, 0.0)
    d_sorted = jnp.sort(d, axis=1)
    return jnp.sum(d_sorted[:, :2], axis=1)


if __name__ == "__main__":
    key = jax.random.PRNGKey(0)
    k_x, k_w, k_b, k_tr = jax.random.split(key, 4)

    B, C, H, W = 2, 4, 16, 16
    D = 32         # feature dim produced by the encoder
    N = 64         # number of stored train features

    x = jax.random.normal(k_x, (B, C, H, W), dtype=jnp.float32)
    enc_w = jax.random.normal(k_w, (C * H * W, D), dtype=jnp.float32) * 0.02
    enc_b = jax.random.normal(k_b, (D,), dtype=jnp.float32) * 0.01
    train_features = jax.random.normal(k_tr, (N, D), dtype=jnp.float32)

    out = wrap_model_1_forward(x, enc_w, enc_b, train_features)
    out = jax.block_until_ready(out)

    ref = _reference(x, enc_w, enc_b, train_features)
    assert out.shape == (B,)
    assert jnp.allclose(out, ref, rtol=1e-3, atol=1e-3), (out, ref)

    print("KERNEL_OK")
</pallas_src>

<mosaic_0001>
module attributes {stable_mosaic.version = 11 : i64} {
  func.func @_knn_kernel(%arg0: i32, %arg1: i32, %arg2: memref<8x1024xbf16, #tpu.memory_space<vmem>>, %arg3: memref<1024x128xbf16, #tpu.memory_space<vmem>>, %arg4: memref<1x128xf32, #tpu.memory_space<vmem>>, %arg5: memref<128x128xbf16, #tpu.memory_space<vmem>>, %arg6: memref<8x1xf32, #tpu.memory_space<vmem>>, %arg7: memref<8x128xf32, #tpu.memory_space<vmem>>, %arg8: memref<8x1xf32, #tpu.memory_space<vmem>>, %arg9: memref<8x1xf32, #tpu.memory_space<vmem>>, %arg10: memref<8x1xf32, #tpu.memory_space<vmem>>) attributes {dimension_semantics = [#tpu.dimension_semantics<parallel>, #tpu.dimension_semantics<arbitrary>], iteration_bounds = array<i64: 1, 1>, scalar_prefetch = 0 : i64, scratch_operands = 4 : i64, tpu.core_type = #tpu.core_type<tc>, window_params = [{transform_indices = @transform_0, window_bounds = array<i64: 8, 1024>}, {pipeline_mode = #tpu.pipeline_mode<synchronous>, transform_indices = @transform_1, window_bounds = array<i64: 1024, 128>}, {pipeline_mode = #tpu.pipeline_mode<synchronous>, transform_indices = @transform_2, window_bounds = array<i64: 1, 128>}, {transform_indices = @transform_3, window_bounds = array<i64: 128, 128>}, {transform_indices = @transform_4, window_bounds = array<i64: 8, 1>}]} {
    %c0_i32 = arith.constant 0 : i32
    %0 = arith.cmpi eq, %arg1, %c0_i32 : i32
    %1 = arith.extui %0 : i1 to i32
    %c0_i32_0 = arith.constant 0 : i32
    %2 = arith.cmpi ne, %1, %c0_i32_0 : i32
    scf.if %2 {
      %c0_22 = arith.constant 0 : index
      %c0_23 = arith.constant 0 : index
      %50 = vector.load %arg2[%c0_22, %c0_23] : memref<8x1024xbf16, #tpu.memory_space<vmem>>, vector<8x1024xbf16>
      %c0_24 = arith.constant 0 : index
      %c0_25 = arith.constant 0 : index
      %51 = vector.load %arg3[%c0_24, %c0_25] : memref<1024x128xbf16, #tpu.memory_space<vmem>>, vector<1024x128xbf16>
      %cst_26 = arith.constant dense<0.000000e+00> : vector<8x128xf32>
      %52 = tpu.matmul %50, %51, %cst_26 {dimension_numbers = #tpu.dot_dimension_numbers<[1], [0], [0], [1], [0, 0, 1, 1], [], []>} : vector<8x1024xbf16>, vector<1024x128xbf16>, vector<8x128xf32> -> vector<8x128xf32>
      %c0_27 = arith.constant 0 : index
      %c0_28 = arith.constant 0 : index
      %53 = vector.load %arg4[%c0_27, %c0_28] : memref<1x128xf32, #tpu.memory_space<vmem>>, vector<1x128xf32>
      %54 = vector.broadcast %53 : vector<1x128xf32> to vector<8x128xf32>
      %55 = arith.addf %52, %54 : vector<8x128xf32>
      %c0_29 = arith.constant 0 : index
      %c0_30 = arith.constant 0 : index
      %56 = vector.load %arg7[%c0_29, %c0_30] : memref<8x128xf32, #tpu.memory_space<vmem>>, vector<8x128xf32>
      tpu.vector_store %arg7[%c0_29, %c0_30], %55 {strides = array<i32>} : memref<8x128xf32, #tpu.memory_space<vmem>>, vector<8x128xf32>,
      %57 = arith.mulf %55, %55 : vector<8x128xf32>
      %cst_31 = arith.constant dense<0.000000e+00> : vector<8xf32>
      %58 = vector.multi_reduction <add>, %57, %cst_31 [1] : vector<8x128xf32> to vector<8xf32>
      %59 = vector.shape_cast %58 : vector<8xf32> to vector<8x1xf32>
      %c0_32 = arith.constant 0 : index
      %c0_33 = arith.constant 0 : index
      %60 = vector.load %arg8[%c0_32, %c0_33] : memref<8x1xf32, #tpu.memory_space<vmem>>, vector<8x1xf32>
      tpu.vector_store %arg8[%c0_32, %c0_33], %59 {strides = array<i32>} : memref<8x1xf32, #tpu.memory_space<vmem>>, vector<8x1xf32>,
      %cst_34 = arith.constant 0x7F800000 : f32
      %61 = vector.broadcast %cst_34 : f32 to vector<8x1xf32>
      %c0_35 = arith.constant 0 : index
      %c0_36 = arith.constant 0 : index
      %62 = vector.load %arg9[%c0_35, %c0_36] : memref<8x1xf32, #tpu.memory_space<vmem>>, vector<8x1xf32>
      tpu.vector_store %arg9[%c0_35, %c0_36], %61 {strides = array<i32>} : memref<8x1xf32, #tpu.memory_space<vmem>>, vector<8x1xf32>,
      %cst_37 = arith.constant 0x7F800000 : f32
      %63 = vector.broadcast %cst_37 : f32 to vector<8x1xf32>
      %c0_38 = arith.constant 0 : index
      %c0_39 = arith.constant 0 : index
      %64 = vector.load %arg10[%c0_38, %c0_39] : memref<8x1xf32, #tpu.memory_space<vmem>>, vector<8x1xf32>
      tpu.vector_store %arg10[%c0_38, %c0_39], %63 {strides = array<i32>} : memref<8x1xf32, #tpu.memory_space<vmem>>, vector<8x1xf32>,
    } else {
    }
    %c0 = arith.constant 0 : index
    %c0_1 = arith.constant 0 : index
    %3 = vector.load %arg5[%c0, %c0_1] : memref<128x128xbf16, #tpu.memory_space<vmem>>, vector<128x128xbf16>
    %4 = arith.extf %3 : vector<128x128xbf16> to vector<128x128xf32>
    %c0_2 = arith.constant 0 : index
    %c0_3 = arith.constant 0 : index
    %5 = vector.load %arg7[%c0_2, %c0_3] : memref<8x128xf32, #tpu.memory_space<vmem>>, vector<8x128xf32>
    %cst = arith.constant dense<0.000000e+00> : vector<8x128xf32>
    %6 = tpu.matmul %5, %4, %cst {dimension_numbers = #tpu.dot_dimension_numbers<[1], [0], [0], [1], [0, 0, 1, 1], [], []>} : vector<8x128xf32>, vector<128x128xf32>, vector<8x128xf32> -> vector<8x128xf32>
    %7 = arith.mulf %4, %4 : vector<128x128xf32>
    %cst_4 = arith.constant dense<0.000000e+00> : vector<128xf32>
    %8 = vector.multi_reduction <add>, %7, %cst_4 [0] : vector<128x128xf32> to vector<128xf32>
    %9 = vector.shape_cast %8 : vector<128xf32> to vector<1x128xf32>
    %cst_5 = arith.constant 2.000000e+00 : f32
    %10 = vector.broadcast %cst_5 : f32 to vector<8x128xf32>
    %11 = arith.mulf %10, %6 : vector<8x128xf32>
    %12 = vector.broadcast %9 : vector<1x128xf32> to vector<8x128xf32>
    %13 = arith.subf %12, %11 : vector<8x128xf32>
    %14 = tpu.iota {dimensions = array<i32: 1>} : vector<8x128xi32>
    %c128_i32 = arith.constant 128 : i32
    %15 = arith.muli %arg1, %c128_i32 : i32
    %16 = vector.broadcast %15 : i32 to vector<8x128xi32>
    %17 = arith.addi %14, %16 : vector<8x128xi32>
    %c64_i32 = arith.constant 64 : i32
    %18 = vector.broadcast %c64_i32 : i32 to vector<8x128xi32>
    %19 = arith.cmpi slt, %17, %18 : vector<8x128xi32>
    %cst_6 = arith.constant 0x7F800000 : f32
    %20 = vector.broadcast %cst_6 : f32 to vector<8x128xf32>
    %21 = arith.select %19, %13, %20 : vector<8x128xi1>, vector<8x128xf32>
    %cst_7 = arith.constant dense<0x7F800000> : vector<8xf32>
    %22 = vector.multi_reduction <minimumf>, %21, %cst_7 [1] : vector<8x128xf32> to vector<8xf32>
    %23 = vector.shape_cast %22 : vector<8xf32> to vector<8x1xf32>
    %24 = vector.broadcast %23 : vector<8x1xf32> to vector<8x128xf32>
    %25 = arith.cmpf ogt, %21, %24 : vector<8x128xf32>
    %cst_8 = arith.constant 0x7F800000 : f32
    %26 = vector.broadcast %cst_8 : f32 to vector<8x128xf32>
    %27 = arith.select %25, %21, %26 : vector<8x128xi1>, vector<8x128xf32>
    %cst_9 = arith.constant dense<0x7F800000> : vector<8xf32>
    %28 = vector.multi_reduction <minimumf>, %27, %cst_9 [1] : vector<8x128xf32> to vector<8xf32>
    %29 = vector.shape_cast %28 : vector<8xf32> to vector<8x1xf32>
    %30 = vector.broadcast %23 : vector<8x1xf32> to vector<8x128xf32>
    %31 = arith.cmpf ole, %21, %30 : vector<8x128xf32>
    %32 = arith.extui %31 : vector<8x128xi1> to vector<8x128xi32>
    %33 = arith.sitofp %32 : vector<8x128xi32> to vector<8x128xf32>
    %cst_10 = arith.constant dense<0.000000e+00> : vector<8xf32>
    %34 = vector.multi_reduction <add>, %33, %cst_10 [1] : vector<8x128xf32> to vector<8xf32>
    %35 = vector.shape_cast %34 : vector<8xf32> to vector<8x1xf32>
    %cst_11 = arith.constant 2.000000e+00 : f32
    %36 = vector.broadcast %cst_11 : f32 to vector<8x1xf32>
    %37 = arith.cmpf oge, %35, %36 : vector<8x1xf32>
    %38 = arith.select %37, %23, %29 : vector<8x1xi1>, vector<8x1xf32>
    %c0_12 = arith.constant 0 : index
    %c0_13 = arith.constant 0 : index
    %39 = vector.load %arg9[%c0_12, %c0_13] : memref<8x1xf32, #tpu.memory_space<vmem>>, vector<8x1xf32>
    %c0_14 = arith.constant 0 : index
    %c0_15 = arith.constant 0 : index
    %40 = vector.load %arg10[%c0_14, %c0_15] : memref<8x1xf32, #tpu.memory_space<vmem>>, vector<8x1xf32>
    %41 = arith.minimumf %39, %23 : vector<8x1xf32>
    %c0_16 = arith.constant 0 : index
    %c0_17 = arith.constant 0 : index
    %42 = vector.load %arg9[%c0_16, %c0_17] : memref<8x1xf32, #tpu.memory_space<vmem>>, vector<8x1xf32>
    tpu.vector_store %arg9[%c0_16, %c0_17], %41 {strides = array<i32>} : memref<8x1xf32, #tpu.memory_space<vmem>>, vector<8x1xf32>,
    %43 = arith.minimumf %40, %38 : vector<8x1xf32>
    %44 = arith.maximumf %39, %23 : vector<8x1xf32>
    %45 = arith.minimumf %43, %44 : vector<8x1xf32>
    %c0_18 = arith.constant 0 : index
    %c0_19 = arith.constant 0 : index
    %46 = vector.load %arg10[%c0_18, %c0_19] : memref<8x1xf32, #tpu.memory_space<vmem>>, vector<8x1xf32>
    tpu.vector_store %arg10[%c0_18, %c0_19], %45 {strides = array<i32>} : memref<8x1xf32, #tpu.memory_space<vmem>>, vector<8x1xf32>,
    %c0_i32_20 = arith.constant 0 : i32
    %47 = arith.cmpi eq, %arg1, %c0_i32_20 : i32
    %48 = arith.extui %47 : i1 to i32
    %c0_i32_21 = arith.constant 0 : i32
    %49 = arith.cmpi ne, %48, %c0_i32_21 : i32
    scf.if %49 {
      %c0_22 = arith.constant 0 : index
      %c0_23 = arith.constant 0 : index
      %50 = vector.load %arg8[%c0_22, %c0_23] : memref<8x1xf32, #tpu.memory_space<vmem>>, vector<8x1xf32>
      %c0_24 = arith.constant 0 : index
      %c0_25 = arith.constant 0 : index
      %51 = vector.load %arg9[%c0_24, %c0_25] : memref<8x1xf32, #tpu.memory_space<vmem>>, vector<8x1xf32>
      %52 = arith.addf %51, %50 : vector<8x1xf32>
      %cst_26 = arith.constant 0.000000e+00 : f32
      %53 = vector.broadcast %cst_26 : f32 to vector<8x1xf32>
      %54 = arith.maximumf %52, %53 : vector<8x1xf32>
      %c0_27 = arith.constant 0 : index
      %c0_28 = arith.constant 0 : index
      %55 = vector.load %arg10[%c0_27, %c0_28] : memref<8x1xf32, #tpu.memory_space<vmem>>, vector<8x1xf32>
      %56 = arith.addf %55, %50 : vector<8x1xf32>
      %cst_29 = arith.constant 0.000000e+00 : f32
      %57 = vector.broadcast %cst_29 : f32 to vector<8x1xf32>
      %58 = arith.maximumf %56, %57 : vector<8x1xf32>
      %59 = arith.addf %54, %58 : vector<8x1xf32>
      %c0_30 = arith.constant 0 : index
      %c0_31 = arith.constant 0 : index
      %60 = vector.load %arg6[%c0_30, %c0_31] : memref<8x1xf32, #tpu.memory_space<vmem>>, vector<8x1xf32>
      tpu.vector_store %arg6[%c0_30, %c0_31], %59 {strides = array<i32>} : memref<8x1xf32, #tpu.memory_space<vmem>>, vector<8x1xf32>,
    } else {
    }
    return
  }
  func.func @transform_0(%arg0: i32, %arg1: i32) -> (i32, i32) {
    %c0_i32 = arith.constant 0 : i32
    %c0_i32_0 = arith.constant 0 : i32
    return %arg0, %c0_i32 : i32, i32
  }
  func.func @transform_1(%arg0: i32, %arg1: i32) -> (i32, i32) {
    %c0_i32 = arith.constant 0 : i32
    %c0_i32_0 = arith.constant 0 : i32
    %c0_i32_1 = arith.constant 0 : i32
    return %c0_i32, %c0_i32_0 : i32, i32
  }
  func.func @transform_2(%arg0: i32, %arg1: i32) -> (i32, i32) {
    %c0_i32 = arith.constant 0 : i32
    %c0_i32_0 = arith.constant 0 : i32
    %c0_i32_1 = arith.constant 0 : i32
    return %c0_i32, %c0_i32_0 : i32, i32
  }
  func.func @transform_3(%arg0: i32, %arg1: i32) -> (i32, i32) {
    %c0_i32 = arith.constant 0 : i32
    %c0_i32_0 = arith.constant 0 : i32
    return %c0_i32, %arg1 : i32, i32
  }
  func.func @transform_4(%arg0: i32, %arg1: i32) -> (i32, i32) {
    %c0_i32 = arith.constant 0 : i32
    %c0_i32_0 = arith.constant 0 : i32
    return %arg0, %c0_i32 : i32, i32
  }
}

</mosaic_0001>

<llo_original>
// kernel: tpu_custom_call.1
$region0: #{tpu_custom_call.1}
  #allocation0 [shape = 'u32[]', space=smem, size = 0x4, offset = 0x4, fixed_abs, tag = 'smem constant byte address 0x4 - core index']
  #allocation1 [shape = 'u32[72,128]{1,0:T(1,128)}', space=vmem, size = 0x9000, scoped, tag = 'internal scratch']
  #allocation2 [shape = 'f32[8,128]{1,0:T(8,128)}', space=vmem, size = 0x1000, scoped, tag = 'scratch operand']
  #allocation3 [shape = 'f32[8,1]{1,0:T(8,128)}', space=vmem, size = 0x1000, scoped, tag = 'scratch operand']
  #allocation4 [shape = 'f32[8,1]{1,0:T(8,128)}', space=vmem, size = 0x1000, scoped, tag = 'scratch operand']
  #allocation5 [shape = 'f32[8,1]{1,0:T(8,128)}', space=vmem, size = 0x1000, scoped, tag = 'scratch operand']
  %s0 = inlined_call_operand.hbm [shape: bf16[8,1024], index: 0, kind: input, shape index: {}]
  %s1 = inlined_call_operand.hbm [shape: bf16[1024,128], index: 1, kind: input, shape index: {}]
  %s2 = inlined_call_operand.vmem [shape: f32[1,128], index: 2, kind: input, shape index: {}]
  %s3 = inlined_call_operand.hbm [shape: bf16[128,128], index: 3, kind: input, shape index: {}]
  %s4 = inlined_call_operand.vmem [shape: f32[8,1], index: 4, kind: output, shape index: {}]
  %s5 = sld [smem:[#allocation0]]
  $region46: #{tpu_custom_call.1} parent=0
    _
  %s7 = ssub.s32 1, %s5
  %s8 = scalar_select 0, %s7, %s5
  $region1: #{tpu_custom_call.1} parent=0
    #allocation6 [shape = 'u8[16384]{0}', space=vmem, size = 0x4000, scoped, tag = 'input window, operand 0, single buffered']
    #allocation7 [shape = 's32[1]{0}', space=sflag, size = 0x4, scoped, tag = 'scoped memory for tpu_custom_call.1']
    #allocation8 [shape = 'u8[262144]{0}', space=vmem, size = 0x40000, scoped, tag = 'input window, operand 1, single buffered']
    #allocation9 [shape = 's32[1]{0}', space=sflag, size = 0x4, scoped, tag = 'scoped memory for tpu_custom_call.1']
    #allocation10 [shape = 'u8[32768]{0}', space=vmem, size = 0x8000, scoped, tag = 'input window, operand 3, single buffered']
    %9 = vsyncpa [#allocation7], 0
    %10 = vsyncpa [#allocation9], 0
    // Predicated region
    $region2: #{tpu_custom_call.1} parent=1 // pred_check
      _
    $region3: #{tpu_custom_call.1} parent=1 // pred_check_branch
      %12 = sbr.rel (0) target = $region5
    $region4: #{tpu_custom_call.1} parent=1 // pred_region
      %14 = vsyncadd [#allocation7], 0
      %s16 = sshll.u32 %s0, 4
      %s17 = int_to_ptr.hbm [resolvable:$true] %s16
      %s18 = sshll.u32 [#allocation6], 4
      %s19 = int_to_ptr.vmem [resolvable:$true] %s18
      %21 = dma.hbm_to_vmem [thread:$0]  %s17, 512, %s19, [#allocation7]
    $region5: #{tpu_custom_call.1} parent=1 // pred_fallthru
      _
    // Predicated region
    $region6: #{tpu_custom_call.1} parent=1 // pred_check
      _
    $region7: #{tpu_custom_call.1} parent=1 // pred_check_branch
      %23 = sbr.rel (0) target = $region9
    $region8: #{tpu_custom_call.1} parent=1 // pred_region
      %25 = vsyncadd [#allocation9], 0
      %s26 = sshll.u32 %s1, 4
      %s27 = int_to_ptr.hbm [resolvable:$true] %s26
      %s28 = sshll.u32 [#allocation8], 4
      %s29 = int_to_ptr.vmem [resolvable:$true] %s28
      %34 = dma.hbm_to_vmem [thread:$0]  %s27, 8192, %s29, [#allocation9], 64, 64, 4
    $region9: #{tpu_custom_call.1} parent=1 // pred_fallthru
      _
    // Predicated region
    $region10: #{tpu_custom_call.1} parent=1 // pred_check
      _
    $region11: #{tpu_custom_call.1} parent=1 // pred_check_branch
      %36 = sbr.rel (0) target = $region13
    $region12: #{tpu_custom_call.1} parent=1 // pred_region
      _
    $region13: #{tpu_custom_call.1} parent=1 // pred_fallthru
      _
    // Predicated region
    $region14: #{tpu_custom_call.1} parent=1 // pred_check
      _
    $region15: #{tpu_custom_call.1} parent=1 // pred_check_branch
      %38 = sbr.rel (0) target = $region17
    $region16: #{tpu_custom_call.1} parent=1 // pred_region
      %40 = vsyncadd [#allocation9], 0
      %s41 = sshll.u32 %s3, 4
      %s42 = int_to_ptr.hbm [resolvable:$true] %s41
      %s43 = sshll.u32 [#allocation10], 4
      %s44 = int_to_ptr.vmem [resolvable:$true] %s43
      %49 = dma.hbm_to_vmem [thread:$0]  %s42, 1024, %s44, [#allocation9], 64, 64, 4
    $region17: #{tpu_custom_call.1} parent=1 // pred_fallthru
      _
    // Predicated region
    $region18: #{tpu_custom_call.1} parent=1 // pred_check
      _
    $region19: #{tpu_custom_call.1} parent=1 // pred_check_branch
      %51 = sbr.rel (0) target = $region21
    $region20: #{tpu_custom_call.1} parent=1 // pred_region
      %53 = dma.done [#allocation7], 512
    $region21: #{tpu_custom_call.1} parent=1 // pred_fallthru
      _
    // Predicated region
    $region22: #{tpu_custom_call.1} parent=1 // pred_check
      _
    $region23: #{tpu_custom_call.1} parent=1 // pred_check_branch
      %55 = sbr.rel (0) target = $region25
    $region24: #{tpu_custom_call.1} parent=1 // pred_region
      %57 = dma.done [#allocation9], 8192
    $region25: #{tpu_custom_call.1} parent=1 // pred_fallthru
      _
    // Predicated region
    $region26: #{tpu_custom_call.1} parent=1 // pred_check
      _
    $region27: #{tpu_custom_call.1} parent=1 // pred_check_branch
      %59 = sbr.rel (0) target = $region29
    $region28: #{tpu_custom_call.1} parent=1 // pred_region
      %61 = dma.done [#allocation9], 1024
    $region29: #{tpu_custom_call.1} parent=1 // pred_fallthru
      _
    %p62 = scmp.eq.s32.totalorder 0, 0
    // Predicated region
    $region30: #{tpu_custom_call.1} parent=1 // pred_check
      %p63 = pneg %p62
    $region31: #{tpu_custom_call.1} parent=1 // pred_check_branch
      %65 = sbr.rel (%p63) target = $region33
    $region32: #{tpu_custom_call.1} parent=1 // pred_region
      %v66 = vld [vmem:[#allocation6] sm:$0xff]
      %v67 = vld [vmem:[#allocation6 + $0x8] sm:$0xff]
      %v68 = vld [vmem:[#allocation6 + $0x10] sm:$0xff]
      %v69 = vld [vmem:[#allocation6 + $0x18] sm:$0xff]
      %v70 = vld [vmem:[#allocation8] sm:$0xf]
      %v71 = vld [vmem:[#allocation8 + $0x4] sm:$0xf]
      %v72 = vld [vmem:[#allocation8 + $0x8] sm:$0xf]
      %v73 = vld [vmem:[#allocation8 + $0xc] sm:$0xf]
      %v74 = vld [vmem:[#allocation8 + $0x10] sm:$0xf]
      %v75 = vld [vmem:[#allocation8 + $0x14] sm:$0xf]
      %v76 = vld [vmem:[#allocation8 + $0x18] sm:$0xf]
      %v77 = vld [vmem:[#allocation8 + $0x1c] sm:$0xf]
      %v78 = vld [vmem:[#allocation8 + $0x20] sm:$0xf]
      %v79 = vld [vmem:[#allocation8 + $0x24] sm:$0xf]
      %v80 = vld [vmem:[#allocation8 + $0x28] sm:$0xf]
      %v81 = vld [vmem:[#allocation8 + $0x2c] sm:$0xf]
      %v82 = vld [vmem:[#allocation8 + $0x30] sm:$0xf]
      %v83 = vld [vmem:[#allocation8 + $0x34] sm:$0xf]
      %v84 = vld [vmem:[#allocation8 + $0x38] sm:$0xf]
      %v85 = vld [vmem:[#allocation8 + $0x3c] sm:$0xf]
      %v86 = vld [vmem:[#allocation8 + $0x40] sm:$0xf]
      %v87 = vld [vmem:[#allocation8 + $0x44] sm:$0xf]
      %v88 = vld [vmem:[#allocation8 + $0x48] sm:$0xf]
      %v89 = vld [vmem:[#allocation8 + $0x4c] sm:$0xf]
      %v90 = vld [vmem:[#allocation8 + $0x50] sm:$0xf]
      %v91 = vld [vmem:[#allocation8 + $0x54] sm:$0xf]
      %v92 = vld [vmem:[#allocation8 + $0x58] sm:$0xf]
      %v93 = vld [vmem:[#allocation8 + $0x5c] sm:$0xf]
      %v94 = vld [vmem:[#allocation8 + $0x60] sm:$0xf]
      %v95 = vld [vmem:[#allocation8 + $0x64] sm:$0xf]
      %v96 = vld [vmem:[#allocation8 + $0x68] sm:$0xf]
      %v97 = vld [vmem:[#allocation8 + $0x6c] sm:$0xf]
      %v98 = vld [vmem:[#allocation8 + $0x70] sm:$0xf]
      %v99 = vld [vmem:[#allocation8 + $0x74] sm:$0xf]
      %v100 = vld [vmem:[#allocation8 + $0x78] sm:$0xf]
      %v101 = vld [vmem:[#allocation8 + $0x7c] sm:$0xf]
      %v102 = vld [vmem:[#allocation8 + $0x80] sm:$0xf]
      %v103 = vld [vmem:[#allocation8 + $0x84] sm:$0xf]
      %v104 = vld [vmem:[#allocation8 + $0x88] sm:$0xf]
      %v105 = vld [vmem:[#allocation8 + $0x8c] sm:$0xf]
      %v106 = vld [vmem:[#allocation8 + $0x90] sm:$0xf]
      %v107 = vld [vmem:[#allocation8 + $0x94] sm:$0xf]
      %v108 = vld [vmem:[#allocation8 + $0x98] sm:$0xf]
      %v109 = vld [vmem:[#allocation8 + $0x9c] sm:$0xf]
      %v110 = vld [vmem:[#allocation8 + $0xa0] sm:$0xf]
      %v111 = vld [vmem:[#allocation8 + $0xa4] sm:$0xf]
      %v112 = vld [vmem:[#allocation8 + $0xa8] sm:$0xf]
      %v113 = vld [vmem:[#allocation8 + $0xac] sm:$0xf]
      %v114 = vld [vmem:[#allocation8 + $0xb0] sm:$0xf]
      %v115 = vld [vmem:[#allocation8 + $0xb4] sm:$0xf]
      %v116 = vld [vmem:[#allocation8 + $0xb8] sm:$0xf]
      %v117 = vld [vmem:[#allocation8 + $0xbc] sm:$0xf]
      %v118 = vld [vmem:[#allocation8 + $0xc0] sm:$0xf]
      %v119 = vld [vmem:[#allocation8 + $0xc4] sm:$0xf]
      %v120 = vld [vmem:[#allocation8 + $0xc8] sm:$0xf]
      %v121 = vld [vmem:[#allocation8 + $0xcc] sm:$0xf]
      %v122 = vld [vmem:[#allocation8 + $0xd0] sm:$0xf]
      %v123 = vld [vmem:[#allocation8 + $0xd4] sm:$0xf]
      %v124 = vld [vmem:[#allocation8 + $0xd8] sm:$0xf]
      %v125 = vld [vmem:[#allocation8 + $0xdc] sm:$0xf]
      %v126 = vld [vmem:[#allocation8 + $0xe0] sm:$0xf]
      %v127 = vld [vmem:[#allocation8 + $0xe4] sm:$0xf]
      %v128 = vld [vmem:[#allocation8 + $0xe8] sm:$0xf]
      %v129 = vld [vmem:[#allocation8 + $0xec] sm:$0xf]
      %v130 = vld [vmem:[#allocation8 + $0xf0] sm:$0xf]
      %v131 = vld [vmem:[#allocation8 + $0xf4] sm:$0xf]
      %v132 = vld [vmem:[#allocation8 + $0xf8] sm:$0xf]
      %v133 = vld [vmem:[#allocation8 + $0xfc] sm:$0xf]
      %v134 = vld [vmem:[#allocation8 + $0x100] sm:$0xf]
      %v135 = vld [vmem:[#allocation8 + $0x104] sm:$0xf]
      %v136 = vld [vmem:[#allocation8 + $0x108] sm:$0xf]
      %v137 = vld [vmem:[#allocation8 + $0x10c] sm:$0xf]
      %v138 = vld [vmem:[#allocation8 + $0x110] sm:$0xf]
      %v139 = vld [vmem:[#allocation8 + $0x114] sm:$0xf]
      %v140 = vld [vmem:[#allocation8 + $0x118] sm:$0xf]
      %v141 = vld [vmem:[#allocation8 + $0x11c] sm:$0xf]
      %v142 = vld [vmem:[#allocation8 + $0x120] sm:$0xf]
      %v143 = vld [vmem:[#allocation8 + $0x124] sm:$0xf]
      %v144 = vld [vmem:[#allocation8 + $0x128] sm:$0xf]
      %v145 = vld [vmem:[#allocation8 + $0x12c] sm:$0xf]
      %v146 = vld [vmem:[#allocation8 + $0x130] sm:$0xf]
      %v147 = vld [vmem:[#allocation8 + $0x134] sm:$0xf]
      %v148 = vld [vmem:[#allocation8 + $0x138] sm:$0xf]
      %v149 = vld [vmem:[#allocation8 + $0x13c] sm:$0xf]
      %v150 = vld [vmem:[#allocation8 + $0x140] sm:$0xf]
      %v151 = vld [vmem:[#allocation8 + $0x144] sm:$0xf]
      %v152 = vld [vmem:[#allocation8 + $0x148] sm:$0xf]
      %v153 = vld [vmem:[#allocation8 + $0x14c] sm:$0xf]
      %v154 = vld [vmem:[#allocation8 + $0x150] sm:$0xf]
      %v155 = vld [vmem:[#allocation8 + $0x154] sm:$0xf]
      %v156 = vld [vmem:[#allocation8 + $0x158] sm:$0xf]
      %v157 = vld [vmem:[#allocation8 + $0x15c] sm:$0xf]
      %v158 = vld [vmem:[#allocation8 + $0x160] sm:$0xf]
      %v159 = vld [vmem:[#allocation8 + $0x164] sm:$0xf]
      %v160 = vld [vmem:[#allocation8 + $0x168] sm:$0xf]
      %v161 = vld [vmem:[#allocation8 + $0x16c] sm:$0xf]
      %v162 = vld [vmem:[#allocation8 + $0x170] sm:$0xf]
      %v163 = vld [vmem:[#allocation8 + $0x174] sm:$0xf]
      %v164 = vld [vmem:[#allocation8 + $0x178] sm:$0xf]
      %v165 = vld [vmem:[#allocation8 + $0x17c] sm:$0xf]
      %v166 = vld [vmem:[#allocation8 + $0x180] sm:$0xf]
      %v167 = vld [vmem:[#allocation8 + $0x184] sm:$0xf]
      %v168 = vld [vmem:[#allocation8 + $0x188] sm:$0xf]
      %v169 = vld [vmem:[#allocation8 + $0x18c] sm:$0xf]
      %v170 = vld [vmem:[#allocation8 + $0x190] sm:$0xf]
      %v171 = vld [vmem:[#allocation8 + $0x194] sm:$0xf]
      %v172 = vld [vmem:[#allocation8 + $0x198] sm:$0xf]
      %v173 = vld [vmem:[#allocation8 + $0x19c] sm:$0xf]
      %v174 = vld [vmem:[#allocation8 + $0x1a0] sm:$0xf]
      %v175 = vld [vmem:[#allocation8 + $0x1a4] sm:$0xf]
      %v176 = vld [vmem:[#allocation8 + $0x1a8] sm:$0xf]
      %v177 = vld [vmem:[#allocation8 + $0x1ac] sm:$0xf]
      %v178 = vld [vmem:[#allocation8 + $0x1b0] sm:$0xf]
      %v179 = vld [vmem:[#allocation8 + $0x1b4] sm:$0xf]
      %v180 = vld [vmem:[#allocation8 + $0x1b8] sm:$0xf]
      %v181 = vld [vmem:[#allocation8 + $0x1bc] sm:$0xf]
      %v182 = vld [vmem:[#allocation8 + $0x1c0] sm:$0xf]
      %v183 = vld [vmem:[#allocation8 + $0x1c4] sm:$0xf]
      %v184 = vld [vmem:[#allocation8 + $0x1c8] sm:$0xf]
      %v185 = vld [vmem:[#allocation8 + $0x1cc] sm:$0xf]
      %v186 = vld [vmem:[#allocation8 + $0x1d0] sm:$0xf]
      %v187 = vld [vmem:[#allocation8 + $0x1d4] sm:$0xf]
      %v188 = vld [vmem:[#allocation8 + $0x1d8] sm:$0xf]
      %v189 = vld [vmem:[#allocation8 + $0x1dc] sm:$0xf]
      %v190 = vld [vmem:[#allocation8 + $0x1e0] sm:$0xf]
      %v191 = vld [vmem:[#allocation8 + $0x1e4] sm:$0xf]
      %v192 = vld [vmem:[#allocation8 + $0x1e8] sm:$0xf]
      %v193 = vld [vmem:[#allocation8 + $0x1ec] sm:$0xf]
      %v194 = vld [vmem:[#allocation8 + $0x1f0] sm:$0xf]
      %v195 = vld [vmem:[#allocation8 + $0x1f4] sm:$0xf]
      %v196 = vld [vmem:[#allocation8 + $0x1f8] sm:$0xf]
      %v197 = vld [vmem:[#allocation8 + $0x1fc] sm:$0xf]
      %v198 = vld [vmem:[%s2] sm:$0x1]
      %v200 = vperm.slane %v198, 0
      %v206 = vunpack.c.l.b16 %v66
      %v207 = vunpack.c.h.b16 %v66
      %v208 = vunpack.c.l.b16 %v67
      %v209 = vunpack.c.h.b16 %v67
      %v210 = vunpack.c.l.b16 %v68
      %v211 = vunpack.c.h.b16 %v68
      %v212 = vunpack.c.l.b16 %v69
      %v213 = vunpack.c.h.b16 %v69
      %v214 = vpack.c.b16 %v206, %v206
      %v215 = vpack.c.b16 %v207, %v207
      %v216 = vpack.c.b16 %v208, %v208
      %v217 = vpack.c.b16 %v209, %v209
      %v218 = vpack.c.b16 %v210, %v210
      %v219 = vpack.c.b16 %v211, %v211
      %v220 = vpack.c.b16 %v212, %v212
      %v221 = vpack.c.b16 %v213, %v213
      %v358 = vunpack.c.l.b16 %v70
      %v359 = vunpack.c.l.b16 %v71
      %v360 = vunpack.c.l.b16 %v72
      %v361 = vunpack.c.l.b16 %v73
      %v362 = vunpack.c.l.b16 %v74
      %v363 = vunpack.c.l.b16 %v75
      %v364 = vunpack.c.l.b16 %v76
      %v365 = vunpack.c.l.b16 %v77
      %v366 = vunpack.c.l.b16 %v78
      %v367 = vunpack.c.l.b16 %v79
      %v368 = vunpack.c.l.b16 %v80
      %v369 = vunpack.c.l.b16 %v81
      %v370 = vunpack.c.l.b16 %v82
      %v371 = vunpack.c.l.b16 %v83
      %v372 = vunpack.c.l.b16 %v84
      %v373 = vunpack.c.l.b16 %v85
      %v374 = vunpack.c.l.b16 %v86
      %v375 = vunpack.c.l.b16 %v87
      %v376 = vunpack.c.l.b16 %v88
      %v377 = vunpack.c.l.b16 %v89
      %v378 = vunpack.c.l.b16 %v90
      %v379 = vunpack.c.l.b16 %v91
      %v380 = vunpack.c.l.b16 %v92
      %v381 = vunpack.c.l.b16 %v93
      %v382 = vunpack.c.l.b16 %v94
      %v383 = vunpack.c.l.b16 %v95
      %v384 = vunpack.c.l.b16 %v96
      %v385 = vunpack.c.l.b16 %v97
      %v386 = vunpack.c.l.b16 %v98
      %v387 = vunpack.c.l.b16 %v99
      %v388 = vunpack.c.l.b16 %v100
      %v389 = vunpack.c.l.b16 %v101
      %v390 = vunpack.c.l.b16 %v102
      %v391 = vunpack.c.l.b16 %v103
      %v392 = vunpack.c.l.b16 %v104
      %v393 = vunpack.c.l.b16 %v105
      %v394 = vunpack.c.l.b16 %v106
      %v395 = vunpack.c.l.b16 %v107
      %v396 = vunpack.c.l.b16 %v108
      %v397 = vunpack.c.l.b16 %v109
      %v398 = vunpack.c.l.b16 %v110
      %v399 = vunpack.c.l.b16 %v111
      %v400 = vunpack.c.l.b16 %v112
      %v401 = vunpack.c.l.b16 %v113
      %v402 = vunpack.c.l.b16 %v114
      %v403 = vunpack.c.l.b16 %v115
      %v404 = vunpack.c.l.b16 %v116
      %v405 = vunpack.c.l.b16 %v117
      %v406 = vunpack.c.l.b16 %v118
      %v407 = vunpack.c.l.b16 %v119
      %v408 = vunpack.c.l.b16 %v120
      %v409 = vunpack.c.l.b16 %v121
      %v410 = vunpack.c.l.b16 %v122
      %v411 = vunpack.c.l.b16 %v123
      %v412 = vunpack.c.l.b16 %v124
      %v413 = vunpack.c.l.b16 %v125
      %v414 = vunpack.c.l.b16 %v126
      %v415 = vunpack.c.l.b16 %v127
      %v416 = vunpack.c.l.b16 %v128
      %v417 = vunpack.c.l.b16 %v129
      %v418 = vunpack.c.l.b16 %v130
      %v419 = vunpack.c.l.b16 %v131
      %v420 = vunpack.c.l.b16 %v132
      %v421 = vunpack.c.l.b16 %v133
      %v422 = vunpack.c.l.b16 %v134
      %v423 = vunpack.c.l.b16 %v135
      %v424 = vunpack.c.l.b16 %v136
      %v425 = vunpack.c.l.b16 %v137
      %v426 = vunpack.c.l.b16 %v138
      %v427 = vunpack.c.l.b16 %v139
      %v428 = vunpack.c.l.b16 %v140
      %v429 = vunpack.c.l.b16 %v141
      %v430 = vunpack.c.l.b16 %v142
      %v431 = vunpack.c.l.b16 %v143
      %v432 = vunpack.c.l.b16 %v144
      %v433 = vunpack.c.l.b16 %v145
      %v434 = vunpack.c.l.b16 %v146
      %v435 = vunpack.c.l.b16 %v147
      %v436 = vunpack.c.l.b16 %v148
      %v437 = vunpack.c.l.b16 %v149
      %v438 = vunpack.c.l.b16 %v150
      %v439 = vunpack.c.l.b16 %v151
      %v440 = vunpack.c.l.b16 %v152
      %v441 = vunpack.c.l.b16 %v153
      %v442 = vunpack.c.l.b16 %v154
      %v443 = vunpack.c.l.b16 %v155
      %v444 = vunpack.c.l.b16 %v156
      %v445 = vunpack.c.l.b16 %v157
      %v446 = vunpack.c.l.b16 %v158
      %v447 = vunpack.c.l.b16 %v159
      %v448 = vunpack.c.l.b16 %v160
      %v449 = vunpack.c.l.b16 %v161
      %v450 = vunpack.c.l.b16 %v162
      %v451 = vunpack.c.l.b16 %v163
      %v452 = vunpack.c.l.b16 %v164
      %v453 = vunpack.c.l.b16 %v165
      %v454 = vunpack.c.l.b16 %v166
      %v455 = vunpack.c.l.b16 %v167
      %v456 = vunpack.c.l.b16 %v168
      %v457 = vunpack.c.l.b16 %v169
      %v458 = vunpack.c.l.b16 %v170
      %v459 = vunpack.c.l.b16 %v171
      %v460 = vunpack.c.l.b16 %v172
      %v461 = vunpack.c.l.b16 %v173
      %v462 = vunpack.c.l.b16 %v174
      %v463 = vunpack.c.l.b16 %v175
      %v464 = vunpack.c.l.b16 %v176
      %v465 = vunpack.c.l.b16 %v177
      %v466 = vunpack.c.l.b16 %v178
      %v467 = vunpack.c.l.b16 %v179
      %v468 = vunpack.c.l.b16 %v180
      %v469 = vunpack.c.l.b16 %v181
      %v470 = vunpack.c.l.b16 %v182
      %v471 = vunpack.c.l.b16 %v183
      %v472 = vunpack.c.l.b16 %v184
      %v473 = vunpack.c.l.b16 %v185
      %v474 = vunpack.c.l.b16 %v186
      %v475 = vunpack.c.l.b16 %v187
      %v476 = vunpack.c.l.b16 %v188
      %v477 = vunpack.c.l.b16 %v189
      %v478 = vunpack.c.l.b16 %v190
      %v479 = vunpack.c.l.b16 %v191
      %v480 = vunpack.c.l.b16 %v192
      %v481 = vunpack.c.l.b16 %v193
      %v482 = vunpack.c.l.b16 %v194
      %v483 = vunpack.c.l.b16 %v195
      %v484 = vunpack.c.l.b16 %v196
      %v485 = vunpack.c.l.b16 %v197
      %v486 = vpack.c.b16 %v359, %v358
      %v487 = vpack.c.b16 %v361, %v360
      %v488 = vpack.c.b16 %v363, %v362
      %v489 = vpack.c.b16 %v365, %v364
      %v490 = vpack.c.b16 %v367, %v366
      %v491 = vpack.c.b16 %v369, %v368
      %v492 = vpack.c.b16 %v371, %v370
      %v493 = vpack.c.b16 %v373, %v372
      %v494 = vpack.c.b16 %v375, %v374
      %v495 = vpack.c.b16 %v377, %v376
      %v496 = vpack.c.b16 %v379, %v378
      %v497 = vpack.c.b16 %v381, %v380
      %v498 = vpack.c.b16 %v383, %v382
      %v499 = vpack.c.b16 %v385, %v384
      %v500 = vpack.c.b16 %v387, %v386
      %v501 = vpack.c.b16 %v389, %v388
      %v502 = vpack.c.b16 %v391, %v390
      %v503 = vpack.c.b16 %v393, %v392
      %v504 = vpack.c.b16 %v395, %v394
      %v505 = vpack.c.b16 %v397, %v396
      %v506 = vpack.c.b16 %v399, %v398
      %v507 = vpack.c.b16 %v401, %v400
      %v508 = vpack.c.b16 %v403, %v402
      %v509 = vpack.c.b16 %v405, %v404
      %v510 = vpack.c.b16 %v407, %v406
      %v511 = vpack.c.b16 %v409, %v408
      %v512 = vpack.c.b16 %v411, %v410
      %v513 = vpack.c.b16 %v413, %v412
      %v514 = vpack.c.b16 %v415, %v414
      %v515 = vpack.c.b16 %v417, %v416
      %v516 = vpack.c.b16 %v419, %v418
      %v517 = vpack.c.b16 %v421, %v420
      %v518 = vpack.c.b16 %v423, %v422
      %v519 = vpack.c.b16 %v425, %v424
      %v520 = vpack.c.b16 %v427, %v426
      %v521 = vpack.c.b16 %v429, %v428
      %v522 = vpack.c.b16 %v431, %v430
      %v523 = vpack.c.b16 %v433, %v432
      %v524 = vpack.c.b16 %v435, %v434
      %v525 = vpack.c.b16 %v437, %v436
      %v526 = vpack.c.b16 %v439, %v438
      %v527 = vpack.c.b16 %v441, %v440
      %v528 = vpack.c.b16 %v443, %v442
      %v529 = vpack.c.b16 %v445, %v444
      %v530 = vpack.c.b16 %v447, %v446
      %v531 = vpack.c.b16 %v449, %v448
      %v532 = vpack.c.b16 %v451, %v450
      %v533 = vpack.c.b16 %v453, %v452
      %v534 = vpack.c.b16 %v455, %v454
      %v535 = vpack.c.b16 %v457, %v456
      %v536 = vpack.c.b16 %v459, %v458
      %v537 = vpack.c.b16 %v461, %v460
      %v538 = vpack.c.b16 %v463, %v462
      %v539 = vpack.c.b16 %v465, %v464
      %v540 = vpack.c.b16 %v467, %v466
      %v541 = vpack.c.b16 %v469, %v468
      %v542 = vpack.c.b16 %v471, %v470
      %v543 = vpack.c.b16 %v473, %v472
      %v544 = vpack.c.b16 %v475, %v474
      %v545 = vpack.c.b16 %v477, %v476
      %v546 = vpack.c.b16 %v479, %v478
      %v547 = vpack.c.b16 %v481, %v480
      %v548 = vpack.c.b16 %v483, %v482
      %v549 = vpack.c.b16 %v485, %v484
      %614 = vmatpush.bf16.msra.mxu0 %v493
      %615 = vmatpush.bf16.msra.mxu0 %v492
      %616 = vmatpush.bf16.msra.mxu0 %v491
      %617 = vmatpush.bf16.msra.mxu0 %v490
      %618 = vmatpush.bf16.msra.mxu0 %v489
      %619 = vmatpush.bf16.msra.mxu0 %v488
      %620 = vmatpush.bf16.msra.mxu0 %v487
      %621 = vmatpush.bf16.msra.mxu0 %v486
      %622 = vmatmul.bf16.gmra.mxu0 %v214
      %v623 = vpop.f32.mrf.mxu0
      %v624 = vadd.f32 %v200, %v623
      %v625 = vpop.f32.mrf.mxu0
      %626 = vdwg.mxu0
      %627 = vmatpush.bf16.msra.mxu0 %v501
      %628 = vmatpush.bf16.msra.mxu0 %v500
      %629 = vmatpush.bf16.msra.mxu0 %v499
      %630 = vmatpush.bf16.msra.mxu0 %v498
      %631 = vmatpush.bf16.msra.mxu0 %v497
      %632 = vmatpush.bf16.msra.mxu0 %v496
      %633 = vmatpush.bf16.msra.mxu0 %v495
      %634 = vmatpush.bf16.msra.mxu0 %v494
      %635 = vmatmul.bf16.gmra.mxu0 %v215
      %v636 = vpop.f32.mrf.mxu0
      %v637 = vadd.f32 %v624, %v636
      %v638 = vpop.f32.mrf.mxu0
      %639 = vdwg.mxu0
      %640 = vmatpush.bf16.msra.mxu0 %v509
      %641 = vmatpush.bf16.msra.mxu0 %v508
      %642 = vmatpush.bf16.msra.mxu0 %v507
      %643 = vmatpush.bf16.msra.mxu0 %v506
      %644 = vmatpush.bf16.msra.mxu0 %v505
      %645 = vmatpush.bf16.msra.mxu0 %v504
      %646 = vmatpush.bf16.msra.mxu0 %v503
      %647 = vmatpush.bf16.msra.mxu0 %v502
      %648 = vmatmul.bf16.gmra.mxu0 %v216
      %v649 = vpop.f32.mrf.mxu0
      %v650 = vadd.f32 %v637, %v649
      %v651 = vpop.f32.mrf.mxu0
      %652 = vdwg.mxu0
      %653 = vmatpush.bf16.msra.mxu0 %v517
      %654 = vmatpush.bf16.msra.mxu0 %v516
      %655 = vmatpush.bf16.msra.mxu0 %v515
      %656 = vmatpush.bf16.msra.mxu0 %v514
      %657 = vmatpush.bf16.msra.mxu0 %v513
      %658 = vmatpush.bf16.msra.mxu0 %v512
      %659 = vmatpush.bf16.msra.mxu0 %v511
      %660 = vmatpush.bf16.msra.mxu0 %v510
      %661 = vmatmul.bf16.gmra.mxu0 %v217
      %v662 = vpop.f32.mrf.mxu0
      %v663 = vadd.f32 %v650, %v662
      %v664 = vpop.f32.mrf.mxu0
      %665 = vdwg.mxu0
      %666 = vmatpush.bf16.msra.mxu0 %v525
      %667 = vmatpush.bf16.msra.mxu0 %v524
      %668 = vmatpush.bf16.msra.mxu0 %v523
      %669 = vmatpush.bf16.msra.mxu0 %v522
      %670 = vmatpush.bf16.msra.mxu0 %v521
      %671 = vmatpush.bf16.msra.mxu0 %v520
      %672 = vmatpush.bf16.msra.mxu0 %v519
      %673 = vmatpush.bf16.msra.mxu0 %v518
      %674 = vmatmul.bf16.gmra.mxu0 %v218
      %v675 = vpop.f32.mrf.mxu0
      %v676 = vadd.f32 %v663, %v675
      %v677 = vpop.f32.mrf.mxu0
      %678 = vdwg.mxu0
      %679 = vmatpush.bf16.msra.mxu0 %v533
      %680 = vmatpush.bf16.msra.mxu0 %v532
      %681 = vmatpush.bf16.msra.mxu0 %v531
      %682 = vmatpush.bf16.msra.mxu0 %v530
      %683 = vmatpush.bf16.msra.mxu0 %v529
      %684 = vmatpush.bf16.msra.mxu0 %v528
      %685 = vmatpush.bf16.msra.mxu0 %v527
      %686 = vmatpush.bf16.msra.mxu0 %v526
      %687 = vmatmul.bf16.gmra.mxu0 %v219
      %v688 = vpop.f32.mrf.mxu0
      %v689 = vadd.f32 %v676, %v688
      %v690 = vpop.f32.mrf.mxu0
      %691 = vdwg.mxu0
      %692 = vmatpush.bf16.msra.mxu0 %v541
      %693 = vmatpush.bf16.msra.mxu0 %v540
      %694 = vmatpush.bf16.msra.mxu0 %v539
      %695 = vmatpush.bf16.msra.mxu0 %v538
      %696 = vmatpush.bf16.msra.mxu0 %v537
      %697 = vmatpush.bf16.msra.mxu0 %v536
      %698 = vmatpush.bf16.msra.mxu0 %v535
      %699 = vmatpush.bf16.msra.mxu0 %v534
      %700 = vmatmul.bf16.gmra.mxu0 %v220
      %v701 = vpop.f32.mrf.mxu0
      %v702 = vadd.f32 %v689, %v701
      %v703 = vpop.f32.mrf.mxu0
      %704 = vdwg.mxu0
      %705 = vmatpush.bf16.msra.mxu0 %v549
      %706 = vmatpush.bf16.msra.mxu0 %v548
      %707 = vmatpush.bf16.msra.mxu0 %v547
      %708 = vmatpush.bf16.msra.mxu0 %v546
      %709 = vmatpush.bf16.msra.mxu0 %v545
      %710 = vmatpush.bf16.msra.mxu0 %v544
      %711 = vmatpush.bf16.msra.mxu0 %v543
      %712 = vmatpush.bf16.msra.mxu0 %v542
      %713 = vmatmul.bf16.gmra.mxu0 %v221
      %v714 = vpop.f32.mrf.mxu0
      %v715 = vadd.f32 %v702, %v714
      %v716 = vpop.f32.mrf.mxu0
      %717 = vdwg.mxu0
      %718 = vst [vmem:[#allocation2] sm:$0xff] %v715
      %v719 = vmul.f32 %v715, %v715
      %720 = vadd.xlane.f32.xlu0 %v719
      %v721 = vpop.xlane.xlu0 %720
      %vm722 = vcmask 7168
      %723 = vst.msk [vmem:[#allocation3] sm:$0xff] %vm722, %v721
      %724 = vst.msk [vmem:[#allocation4] sm:$0xff] %vm722, inf
      %725 = vst.msk [vmem:[#allocation5] sm:$0xff] %vm722, inf
    $region33: #{tpu_custom_call.1} parent=1 // pred_fallthru
      _
    %v726 = vld [vmem:[#allocation10] sm:$0xf]
    %v727 = vld [vmem:[#allocation10 + $0x4] sm:$0xf]
    %v728 = vld [vmem:[#allocation10 + $0x8] sm:$0xf]
    %v729 = vld [vmem:[#allocation10 + $0xc] sm:$0xf]
    %v730 = vld [vmem:[#allocation10 + $0x10] sm:$0xf]
    %v731 = vld [vmem:[#allocation10 + $0x14] sm:$0xf]
    %v732 = vld [vmem:[#allocation10 + $0x18] sm:$0xf]
    %v733 = vld [vmem:[#allocation10 + $0x1c] sm:$0xf]
    %v734 = vld [vmem:[#allocation10 + $0x20] sm:$0xf]
    %v735 = vld [vmem:[#allocation10 + $0x24] sm:$0xf]
    %v736 = vld [vmem:[#allocation10 + $0x28] sm:$0xf]
    %v737 = vld [vmem:[#allocation10 + $0x2c] sm:$0xf]
    %v738 = vld [vmem:[#allocation10 + $0x30] sm:$0xf]
    %v739 = vld [vmem:[#allocation10 + $0x34] sm:$0xf]
    %v740 = vld [vmem:[#allocation10 + $0x38] sm:$0xf]
    %v741 = vld [vmem:[#allocation10 + $0x3c] sm:$0xf]
    %v742 = vunpack.c.l.bf16 %v726
    %v743 = vunpack.c.l.bf16 %v727
    %v744 = vunpack.c.l.bf16 %v728
    %v745 = vunpack.c.l.bf16 %v729
    %v746 = vunpack.c.l.bf16 %v730
    %v747 = vunpack.c.l.bf16 %v731
    %v748 = vunpack.c.l.bf16 %v732
    %v749 = vunpack.c.l.bf16 %v733
    %v750 = vunpack.c.l.bf16 %v734
    %v751 = vunpack.c.l.bf16 %v735
    %v752 = vunpack.c.l.bf16 %v736
    %v753 = vunpack.c.l.bf16 %v737
    %v754 = vunpack.c.l.bf16 %v738
    %v755 = vunpack.c.l.bf16 %v739
    %v756 = vunpack.c.l.bf16 %v740
    %v757 = vunpack.c.l.bf16 %v741
    %v758 = vld [vmem:[#allocation2] sm:$0xff]
    %759 = vmatpush.msra.mxu0 %v757
    %760 = vmatpush.msra.mxu0 %v756
    %761 = vmatpush.msra.mxu0 %v755
    %762 = vmatpush.msra.mxu0 %v754
    %763 = vmatpush.msra.mxu0 %v753
    %764 = vmatpush.msra.mxu0 %v752
    %765 = vmatpush.msra.mxu0 %v751
    %766 = vmatpush.msra.mxu0 %v750
    %767 = vmatpush.msra.mxu0 %v749
    %768 = vmatpush.msra.mxu0 %v748
    %769 = vmatpush.msra.mxu0 %v747
    %770 = vmatpush.msra.mxu0 %v746
    %771 = vmatpush.msra.mxu0 %v745
    %772 = vmatpush.msra.mxu0 %v744
    %773 = vmatpush.msra.mxu0 %v743
    %774 = vmatpush.msra.mxu0 %v742
    %775 = vmatmul.f32.gmra.mxu0 %v758
    %v776 = vpop.f32.mrf.mxu0
    %v777 = vadd.f32 0.0, %v776
    %778 = vdwg.mxu0
    %v779 = vmul.f32 %v742, %v742
    %v780 = vmul.f32 %v743, %v743
    %v781 = vmul.f32 %v744, %v744
    %v782 = vmul.f32 %v745, %v745
    %v783 = vmul.f32 %v746, %v746
    %v784 = vmul.f32 %v747, %v747
    %v785 = vmul.f32 %v748, %v748
    %v786 = vmul.f32 %v749, %v749
    %v787 = vmul.f32 %v750, %v750
    %v788 = vmul.f32 %v751, %v751
    %v789 = vmul.f32 %v752, %v752
    %v790 = vmul.f32 %v753, %v753
    %v791 = vmul.f32 %v754, %v754
    %v792 = vmul.f32 %v755, %v755
    %v793 = vmul.f32 %v756, %v756
    %v794 = vmul.f32 %v757, %v757
    %v795 = vadd.f32 %v779, %v780
    %v796 = vadd.f32 %v795, %v781
    %v797 = vadd.f32 %v796, %v782
    %v798 = vadd.f32 %v797, %v783
    %v799 = vadd.f32 %v798, %v784
    %v800 = vadd.f32 %v799, %v785
    %v801 = vadd.f32 %v800, %v786
    %v802 = vadd.f32 %v801, %v787
    %v803 = vadd.f32 %v802, %v788
    %v804 = vadd.f32 %v803, %v789
    %v805 = vadd.f32 %v804, %v790
    %v806 = vadd.f32 %v805, %v791
    %v807 = vadd.f32 %v806, %v792
    %v808 = vadd.f32 %v807, %v793
    %v809 = vadd.f32 %v808, %v794
    %v810 = vrot.slane %v809, 4
    %v811 = vadd.f32 %v809, %v810
    %v812 = vrot.slane %v811, 2
    %v813 = vadd.f32 %v811, %v812
    %v814 = vrot.slane %v813, 1
    %v815 = vadd.f32 %v813, %v814
    %v816 = vmul.f32 %v777, 2.0
    %v817 = vsub.f32 %v815, %v816
    %v818 = vlaneseq
    %v819 = vand.u32 %v818, 127
    %s820 = smul.u32 0, 128
    %v821 = vstv %s820
    %v822 = vadd.s32 %v819, %v821
    %vm823 = vcmp.lt.s32.totalorder %v822, 64
    %v824 = vsel %vm823, %v817, inf
    %825 = vmin.xlane.f32.xlu0 %v824
    %v826 = vpop.xlane.xlu0 %825
    %vm827 = vcmp.gt.f32.partialorder %v824, %v826
    %v828 = vsel %vm827, %v824, inf
    %829 = vmin.xlane.f32.xlu0 %v828
    %v830 = vpop.xlane.xlu0 %829
    %vm831 = vcmp.le.f32.partialorder %v824, %v826
    %v832 = vsel %vm831, 1, 0
    %v833 = vcvt.s32.f32 %v832
    %834 = vadd.xlane.f32.xlu0 %v833
    %v835 = vpop.xlane.xlu0 %834
    %vm836 = vcmp.ge.f32.partialorder %v835, 2.0
    %v837 = vsel %vm836, %v826, %v830
    %v838 = vld [vmem:[#allocation4] sm:$0xff]
    %v839 = vld [vmem:[#allocation5] sm:$0xff]
    %v840 = vmin.f32 %v838, %v826
    %vm841 = vcmask 7168
    %842 = vst.msk [vmem:[#allocation4] sm:$0xff] %vm841, %v840
    %v843 = vmin.f32 %v839, %v837
    %v844 = vmax.f32 %v838, %v826
    %v845 = vmin.f32 %v843, %v844
    %846 = vst.msk [vmem:[#allocation5] sm:$0xff] %vm841, %v845
    // Predicated region
    $region34: #{tpu_custom_call.1} parent=1 // pred_check
      %p847 = pneg %p62
    $region35: #{tpu_custom_call.1} parent=1 // pred_check_branch
      %849 = sbr.rel (%p847) target = $region37
    $region36: #{tpu_custom_call.1} parent=1 // pred_region
      %v850 = vld [vmem:[#allocation3] sm:$0xff]
      %v851 = vld [vmem:[#allocation4] sm:$0xff]
      %v852 = vadd.f32 %v851, %v850
      %v853 = vmax.f32 %v852, 0.0
      %v854 = vld [vmem:[#allocation5] sm:$0xff]
      %v855 = vadd.f32 %v854, %v850
      %v856 = vmax.f32 %v855, 0.0
      %v857 = vadd.f32 %v853, %v856
      %858 = vst.msk [vmem:[%s4] sm:$0xff] %vm841, %v857
    $region37: #{tpu_custom_call.1} parent=1 // pred_fallthru
      _
    // Predicated region
    $region38: #{tpu_custom_call.1} parent=1 // pred_check
      _
    $region39: #{tpu_custom_call.1} parent=1 // pred_check_branch
      %860 = sbr.rel (0) target = $region41
    $region40: #{tpu_custom_call.1} parent=1 // pred_region
      _
    $region41: #{tpu_custom_call.1} parent=1 // pred_fallthru
      _
    // Predicated region
    $region42: #{tpu_custom_call.1} parent=1 // pred_check
      _
    $region43: #{tpu_custom_call.1} parent=1 // pred_check_branch
      %862 = sbr.rel (0) target = $region45
    $region44: #{tpu_custom_call.1} parent=1 // pred_region
      _
    $region45: #{tpu_custom_call.1} parent=1 // pred_fallthru
      _
    %863 = vsyncpa [#allocation7], 1
    %864 = vsyncpa [#allocation9], 1

</llo_original>
